<compile_context>
chip_gen: v5e
topology: v5e:2x2
jax: 0.10.0
libtpu: 0.0.40
codegen_flags: <defaults>
</compile_context>

<pallas_src>
import numpy as np
import jax
import jax.numpy as jnp
from jax import lax
from jax.experimental import pallas as pl
from jax.experimental.pallas import tpu as pltpu


# ------------------------------ fused Pallas kernel -------------------------------

def _mixer_kernel(x_ref, w_ref, b_ref, o_ref):
    # x_ref: (C, HW)   w_ref: (n_blocks, C, C)   b_ref: (n_blocks, C, HW)
    n_blocks = w_ref.shape[0]
    x0 = x_ref[...]

    def body(blk, x):
        y = jnp.dot(w_ref[blk], x, preferred_element_type=jnp.float32) + b_ref[blk]
        return jnp.maximum(y, 0.0) + x          # relu(W_eff x + b_eff) + x

    xn = lax.fori_loop(0, n_blocks, body, x0, unroll=True)
    o_ref[...] = xn.astype(o_ref.dtype)


def sequential_mixer_fused(x_nchw, w_eff, b_eff):
    """x_nchw: (B, C, H, W); w_eff: (n_blocks, C, C); b_eff: (n_blocks, C)."""
    B, C, H, W = x_nchw.shape
    HW = H * W
    n_blocks = w_eff.shape[0]

    x = x_nchw.reshape(B, C, HW)                               # pure reshape, no copy
    b_bc = jnp.broadcast_to(b_eff[:, :, None], (n_blocks, C, HW))  # lane-dense bias

    out = pl.pallas_call(
        _mixer_kernel,
        out_shape=jax.ShapeDtypeStruct((B, C, HW), x.dtype),
        grid=(B,),
        in_specs=[
            pl.BlockSpec((None, C, HW), lambda b: (b, 0, 0)),           # activations
            pl.BlockSpec((n_blocks, C, C), lambda b: (0, 0, 0)),        # stacked weights
            pl.BlockSpec((n_blocks, C, HW), lambda b: (0, 0, 0)),       # stacked bias
        ],
        out_specs=pl.BlockSpec((None, C, HW), lambda b: (b, 0, 0)),
        compiler_params=pltpu.CompilerParams(
            dimension_semantics=("parallel",)),
    )(x, w_eff, b_bc)
    return out.reshape(B, C, H, W)


# --------------------- fold butterfly permutation into weights --------------------

def compute_gaps(n_blocks, inplanes, group_sz):
    num_layers = int(np.ceil(np.log(inplanes) / np.log(group_sz)))
    gaps = []
    for i in range(n_blocks):
        gap = group_sz ** (i % num_layers)
        if gap * group_sz > inplanes:
            gap = int(np.ceil(inplanes / group_sz))
        gaps.append(gap)
    return gaps


def fold_butterfly_weights(weights, biases, group_sz, gaps, C):
    """perm -> blockdiag(W) -> unperm  ==  dense W_eff = P^T @ blockdiag(W) @ P."""
    w_eff_list, b_eff_list = [], []
    for (w, b), gap in zip(zip(weights, biases), gaps):
        G = w.shape[0]
        # block-diagonal of per-group (group_sz, group_sz) weights
        Wbd = jnp.zeros((C, C), w.dtype)
        for g in range(G):
            Wbd = Wbd.at[g * group_sz:(g + 1) * group_sz,
                         g * group_sz:(g + 1) * group_sz].set(w[g])
        b_full = b.reshape(C)

        chunk = C // (group_sz * gap)
        # butterfly: channel (q, s, t) -> (q, t, s);  x_perm[i] = x[perm[i]]
        perm = np.arange(C).reshape(chunk, group_sz, gap).transpose(0, 2, 1).reshape(-1)
        P = jnp.asarray(np.eye(C, dtype=np.float32)[perm])   # (P @ v)[i] = v[perm[i]]

        w_eff_list.append(P.T @ Wbd @ P)
        b_eff_list.append(P.T @ b_full)
    return jnp.stack(w_eff_list), jnp.stack(b_eff_list)


# --------------------------- pure-JAX reference (torch semantics) -----------------

def butterfly_perm(x, group_sz, gap):
    B, C, H, W = x.shape
    x = x.reshape(B, -1, group_sz, gap, H, W)
    x = jnp.swapaxes(x, 2, 3)
    return x.reshape(B, -1, H, W)


def butterfly_unperm(x, group_sz, gap):
    B, C, H, W = x.shape
    x = x.reshape(B, -1, gap, group_sz, H, W)
    x = jnp.swapaxes(x, 2, 3)
    return x.reshape(B, -1, H, W)


def _ref_block(x, w, b, group_sz):
    B, C, H, W = x.shape
    G = C // group_sz
    xr = x.reshape(B, G, group_sz, H * W)
    y = jnp.einsum("gij,bgjn->bgin", w, xr) + b[None]
    y = jnp.maximum(y, 0.0) + xr
    return y.reshape(B, C, H, W)


def sequential_mixer_ref(x, weights, biases, group_sz, gaps):
    for (w, b), gap in zip(zip(weights, biases), gaps):
        x = butterfly_perm(x, group_sz, gap)
        x = _ref_block(x, w, b, group_sz)
        x = butterfly_unperm(x, group_sz, gap)
    return x


# ---------------------------------------- main ------------------------------------

if __name__ == "__main__":
    B, inplanes, H, W = 2, 16, 16, 16
    group_sz = 4
    G = inplanes // group_sz
    num_layers = int(np.ceil(np.log(inplanes) / np.log(group_sz)))   # = 2
    n_blocks = 2 * num_layers                                        # two butterfly passes
    gaps = compute_gaps(n_blocks, inplanes, group_sz)                # [1, 4, 1, 4]

    key = jax.random.PRNGKey(0)
    keys = jax.random.split(key, 1 + 2 * n_blocks)
    x = jax.random.normal(keys[0], (B, inplanes, H, W), jnp.float32)
    weights = [0.3 * jax.random.normal(keys[1 + 2 * i], (G, group_sz, group_sz),
                                       jnp.float32) for i in range(n_blocks)]
    biases = [0.1 * jax.random.normal(keys[2 + 2 * i], (G, group_sz, 1),
                                      jnp.float32) for i in range(n_blocks)]

    # Fold butterfly permutations + block-diagonal grouping into dense per-block mats.
    w_eff, b_eff = fold_butterfly_weights(weights, biases, group_sz, gaps, inplanes)

    out = sequential_mixer_fused(x, w_eff, b_eff)
    out = jax.block_until_ready(out)

    ref = sequential_mixer_ref(x, weights, biases, group_sz, gaps)
    assert out.shape == (B, inplanes, H, W)
    assert jnp.allclose(out, ref, atol=1e-5, rtol=1e-5), "mismatch vs pure-JAX reference"

    print("KERNEL_OK")
</pallas_src>

<mosaic_0001>
module attributes {stable_mosaic.version = 11 : i64} {
  func.func @_mixer_kernel(%arg0: i32, %arg1: memref<1x16x256xf32, #tpu.memory_space<vmem>>, %arg2: memref<4x16x16xf32, #tpu.memory_space<vmem>>, %arg3: memref<4x16x256xf32, #tpu.memory_space<vmem>>, %arg4: memref<1x16x256xf32, #tpu.memory_space<vmem>>) attributes {dimension_semantics = [#tpu.dimension_semantics<parallel>], iteration_bounds = array<i64: 2>, scalar_prefetch = 0 : i64, scratch_operands = 0 : i64, tpu.core_type = #tpu.core_type<tc>, window_params = [{transform_indices = @transform_0, window_bounds = array<i64: 1, 16, 256>}, {pipeline_mode = #tpu.pipeline_mode<synchronous>, transform_indices = @transform_1, window_bounds = array<i64: 4, 16, 16>}, {pipeline_mode = #tpu.pipeline_mode<synchronous>, transform_indices = @transform_2, window_bounds = array<i64: 4, 16, 256>}, {transform_indices = @transform_3, window_bounds = array<i64: 1, 16, 256>}]} {
    %c0 = arith.constant 0 : index
    %c0_0 = arith.constant 0 : index
    %c0_1 = arith.constant 0 : index
    %0 = vector.load %arg1[%c0, %c0_0, %c0_1] : memref<1x16x256xf32, #tpu.memory_space<vmem>>, vector<1x16x256xf32>
    %1 = vector.shape_cast %0 : vector<1x16x256xf32> to vector<16x256xf32>
    %c0_i32 = arith.constant 0 : i32
    %2 = arith.index_cast %c0_i32 : i32 to index
    %c0_2 = arith.constant 0 : index
    %c0_3 = arith.constant 0 : index
    %3 = vector.load %arg2[%2, %c0_2, %c0_3] : memref<4x16x16xf32, #tpu.memory_space<vmem>>, vector<1x16x16xf32>
    %4 = vector.shape_cast %3 : vector<1x16x16xf32> to vector<16x16xf32>
    %cst = arith.constant dense<0.000000e+00> : vector<16x256xf32>
    %5 = tpu.matmul %4, %1, %cst {dimension_numbers = #tpu.dot_dimension_numbers<[1], [0], [0], [1], [0, 0, 1, 1], [], []>} : vector<16x16xf32>, vector<16x256xf32>, vector<16x256xf32> -> vector<16x256xf32>
    %6 = arith.index_cast %c0_i32 : i32 to index
    %c0_4 = arith.constant 0 : index
    %c0_5 = arith.constant 0 : index
    %7 = vector.load %arg3[%6, %c0_4, %c0_5] : memref<4x16x256xf32, #tpu.memory_space<vmem>>, vector<1x16x256xf32>
    %8 = vector.shape_cast %7 : vector<1x16x256xf32> to vector<16x256xf32>
    %9 = arith.addf %5, %8 : vector<16x256xf32>
    %cst_6 = arith.constant 0.000000e+00 : f32
    %10 = vector.broadcast %cst_6 : f32 to vector<16x256xf32>
    %11 = arith.maximumf %9, %10 : vector<16x256xf32>
    %12 = arith.addf %11, %1 : vector<16x256xf32>
    %c1_i32 = arith.constant 1 : i32
    %13 = arith.index_cast %c1_i32 : i32 to index
    %c0_7 = arith.constant 0 : index
    %c0_8 = arith.constant 0 : index
    %14 = vector.load %arg2[%13, %c0_7, %c0_8] : memref<4x16x16xf32, #tpu.memory_space<vmem>>, vector<1x16x16xf32>
    %15 = vector.shape_cast %14 : vector<1x16x16xf32> to vector<16x16xf32>
    %cst_9 = arith.constant dense<0.000000e+00> : vector<16x256xf32>
    %16 = tpu.matmul %15, %12, %cst_9 {dimension_numbers = #tpu.dot_dimension_numbers<[1], [0], [0], [1], [0, 0, 1, 1], [], []>} : vector<16x16xf32>, vector<16x256xf32>, vector<16x256xf32> -> vector<16x256xf32>
    %17 = arith.index_cast %c1_i32 : i32 to index
    %c0_10 = arith.constant 0 : index
    %c0_11 = arith.constant 0 : index
    %18 = vector.load %arg3[%17, %c0_10, %c0_11] : memref<4x16x256xf32, #tpu.memory_space<vmem>>, vector<1x16x256xf32>
    %19 = vector.shape_cast %18 : vector<1x16x256xf32> to vector<16x256xf32>
    %20 = arith.addf %16, %19 : vector<16x256xf32>
    %cst_12 = arith.constant 0.000000e+00 : f32
    %21 = vector.broadcast %cst_12 : f32 to vector<16x256xf32>
    %22 = arith.maximumf %20, %21 : vector<16x256xf32>
    %23 = arith.addf %22, %12 : vector<16x256xf32>
    %c2_i32 = arith.constant 2 : i32
    %24 = arith.index_cast %c2_i32 : i32 to index
    %c0_13 = arith.constant 0 : index
    %c0_14 = arith.constant 0 : index
    %25 = vector.load %arg2[%24, %c0_13, %c0_14] : memref<4x16x16xf32, #tpu.memory_space<vmem>>, vector<1x16x16xf32>
    %26 = vector.shape_cast %25 : vector<1x16x16xf32> to vector<16x16xf32>
    %cst_15 = arith.constant dense<0.000000e+00> : vector<16x256xf32>
    %27 = tpu.matmul %26, %23, %cst_15 {dimension_numbers = #tpu.dot_dimension_numbers<[1], [0], [0], [1], [0, 0, 1, 1], [], []>} : vector<16x16xf32>, vector<16x256xf32>, vector<16x256xf32> -> vector<16x256xf32>
    %28 = arith.index_cast %c2_i32 : i32 to index
    %c0_16 = arith.constant 0 : index
    %c0_17 = arith.constant 0 : index
    %29 = vector.load %arg3[%28, %c0_16, %c0_17] : memref<4x16x256xf32, #tpu.memory_space<vmem>>, vector<1x16x256xf32>
    %30 = vector.shape_cast %29 : vector<1x16x256xf32> to vector<16x256xf32>
    %31 = arith.addf %27, %30 : vector<16x256xf32>
    %cst_18 = arith.constant 0.000000e+00 : f32
    %32 = vector.broadcast %cst_18 : f32 to vector<16x256xf32>
    %33 = arith.maximumf %31, %32 : vector<16x256xf32>
    %34 = arith.addf %33, %23 : vector<16x256xf32>
    %c3_i32 = arith.constant 3 : i32
    %35 = arith.index_cast %c3_i32 : i32 to index
    %c0_19 = arith.constant 0 : index
    %c0_20 = arith.constant 0 : index
    %36 = vector.load %arg2[%35, %c0_19, %c0_20] : memref<4x16x16xf32, #tpu.memory_space<vmem>>, vector<1x16x16xf32>
    %37 = vector.shape_cast %36 : vector<1x16x16xf32> to vector<16x16xf32>
    %cst_21 = arith.constant dense<0.000000e+00> : vector<16x256xf32>
    %38 = tpu.matmul %37, %34, %cst_21 {dimension_numbers = #tpu.dot_dimension_numbers<[1], [0], [0], [1], [0, 0, 1, 1], [], []>} : vector<16x16xf32>, vector<16x256xf32>, vector<16x256xf32> -> vector<16x256xf32>
    %39 = arith.index_cast %c3_i32 : i32 to index
    %c0_22 = arith.constant 0 : index
    %c0_23 = arith.constant 0 : index
    %40 = vector.load %arg3[%39, %c0_22, %c0_23] : memref<4x16x256xf32, #tpu.memory_space<vmem>>, vector<1x16x256xf32>
    %41 = vector.shape_cast %40 : vector<1x16x256xf32> to vector<16x256xf32>
    %42 = arith.addf %38, %41 : vector<16x256xf32>
    %cst_24 = arith.constant 0.000000e+00 : f32
    %43 = vector.broadcast %cst_24 : f32 to vector<16x256xf32>
    %44 = arith.maximumf %42, %43 : vector<16x256xf32>
    %45 = arith.addf %44, %34 : vector<16x256xf32>
    %c4_i32 = arith.constant 4 : i32
    %c0_25 = arith.constant 0 : index
    %c0_26 = arith.constant 0 : index
    %c0_27 = arith.constant 0 : index
    %46 = vector.load %arg4[%c0_25, %c0_26, %c0_27] : memref<1x16x256xf32, #tpu.memory_space<vmem>>, vector<1x16x256xf32>
    %47 = vector.shape_cast %46 : vector<1x16x256xf32> to vector<16x256xf32>
    %48 = vector.shape_cast %45 : vector<16x256xf32> to vector<1x16x256xf32>
    tpu.vector_store %arg4[%c0_25, %c0_26, %c0_27], %48 {strides = array<i32>} : memref<1x16x256xf32, #tpu.memory_space<vmem>>, vector<1x16x256xf32>,
    return
  }
  func.func @transform_0(%arg0: i32) -> (i32, i32, i32) {
    %c0_i32 = arith.constant 0 : i32
    %c0_i32_0 = arith.constant 0 : i32
    %c0_i32_1 = arith.constant 0 : i32
    return %arg0, %c0_i32, %c0_i32_0 : i32, i32, i32
  }
  func.func @transform_1(%arg0: i32) -> (i32, i32, i32) {
    %c0_i32 = arith.constant 0 : i32
    %c0_i32_0 = arith.constant 0 : i32
    %c0_i32_1 = arith.constant 0 : i32
    %c0_i32_2 = arith.constant 0 : i32
    return %c0_i32, %c0_i32_0, %c0_i32_1 : i32, i32, i32
  }
  func.func @transform_2(%arg0: i32) -> (i32, i32, i32) {
    %c0_i32 = arith.constant 0 : i32
    %c0_i32_0 = arith.constant 0 : i32
    %c0_i32_1 = arith.constant 0 : i32
    %c0_i32_2 = arith.constant 0 : i32
    return %c0_i32, %c0_i32_0, %c0_i32_1 : i32, i32, i32
  }
  func.func @transform_3(%arg0: i32) -> (i32, i32, i32) {
    %c0_i32 = arith.constant 0 : i32
    %c0_i32_0 = arith.constant 0 : i32
    %c0_i32_1 = arith.constant 0 : i32
    return %arg0, %c0_i32, %c0_i32_0 : i32, i32, i32
  }
}

</mosaic_0001>

<llo_original>
// kernel: tpu_custom_call.1
$region0: #{tpu_custom_call.1}
  #allocation0 [shape = 'u32[]', space=smem, size = 0x4, offset = 0x4, fixed_abs, tag = 'smem constant byte address 0x4 - core index']
  #allocation1 [shape = 'u32[72,128]{1,0:T(1,128)}', space=vmem, size = 0x9000, scoped, tag = 'internal scratch']
  %s0 = inlined_call_operand.hbm [shape: f32[2,16,256], index: 0, kind: input, shape index: {}]
  %s1 = inlined_call_operand.hbm [shape: f32[4,16,16], index: 1, kind: input, shape index: {}]
  %s2 = inlined_call_operand.hbm [shape: f32[4,16,256], index: 2, kind: input, shape index: {}]
  %s3 = inlined_call_operand.hbm [shape: f32[2,16,256], index: 3, kind: output, shape index: {}]
  %s4 = sld [smem:[#allocation0]]
  $region57: #{tpu_custom_call.1} parent=0
    _
  %s6 = ssub.s32 1, %s4
  %s7 = scalar_select 0, %s6, %s4
  $region1: #{tpu_custom_call.1} parent=0
    #allocation2 [shape = 'u8[32768]{0}', space=vmem, size = 0x8000, scoped, tag = 'input window, operand 0']
    #allocation3 [shape = 's32[2]{0}', space=sflag, size = 0x8, scoped, tag = 'scoped memory for tpu_custom_call.1']
    #allocation4 [shape = 's32[2]{0}', space=sflag, size = 0x8, scoped, tag = 'scoped memory for tpu_custom_call.1']
    #allocation5 [shape = 'u8[32768]{0}', space=vmem, size = 0x8000, scoped, tag = 'input window, operand 1, single buffered']
    #allocation6 [shape = 's32[1]{0}', space=sflag, size = 0x4, scoped, tag = 'scoped memory for tpu_custom_call.1']
    #allocation7 [shape = 'u8[65536]{0}', space=vmem, size = 0x10000, scoped, tag = 'input window, operand 2, single buffered']
    #allocation8 [shape = 'u8[32768]{0}', space=vmem, size = 0x8000, scoped, tag = 'output window, operand 0']
    %8 = vsyncpa [#allocation3], 0
    %s9 = scalar_lea.sflag [#allocation3], 1
    %10 = vsyncpa %s9, 0
    %11 = vsyncpa [#allocation6], 0
    %12 = vsyncpa [#allocation4], 0
    %s13 = scalar_lea.sflag [#allocation4], 1
    %14 = vsyncpa %s13, 0
    loop: start=0, step=1, limit=4
    $region2: #{tpu_custom_call.1} parent=1 // loop_pre_header
      _
    $region3: #{tpu_custom_call.1} parent=1 // loop_header
      %s16 = sphi 0, %s20
      %p17 = scmp.ge.s32.totalorder %s16, 4
      %s26 = sphi 0, %s28
      %s29 = sphi 0, %s26
      %s30 = sphi 0, %s29
      %s46 = sphi 0, %s30
      %s50 = sphi 0, %s50
      %s52 = sphi 0, %s50
      %s53 = sphi 0, %s52
      %s67 = sphi 0, %s53
      %s71 = sphi 0, %s71
      %s73 = sphi 0, %s71
      %s74 = sphi 0, %s73
      %s88 = sphi 0, %s74
      %s94 = sphi 0, %s96
      %s97 = sphi 0, %s94
      %s98 = sphi 0, %s97
      %s114 = sphi 0, %s98
    $region4: #{tpu_custom_call.1} parent=1 // loop_header_branch
      %19 = sbr.rel (%p17) target = $region8
    $region5: #{tpu_custom_call.1} parent=1 // loop_body
      %s21 = ssub.s32 %s16, 1
      %s22 = ssub.s32 %s16, 2
      %s23 = sadd.s32 %s16, 1
      %s24 = ssub.s32 %s16, %s23
      %p25 = scmp.eq.s32.totalorder %s24, 0
      %s27 = sadd.s32 %s26, 1
      %s28 = scalar_select %p25, %s26, %s27
      %p31 = pneg %p25
      %p32 = scmp.eq.s32.totalorder %s16, 1
      %p33 = por %p31, %p32
      %p34 = scmp.ne.s32.totalorder %s26, %s29
      %p35 = scmp.eq.s32.totalorder %s16, 0
      %p36 = por %p34, %p35
      %p37 = scmp.ne.s32.totalorder %s26, %s29
      %p38 = scmp.eq.s32.totalorder %s21, 1
      %p39 = por %p37, %p38
      %p40 = scmp.ne.s32.totalorder %s29, %s30
      %p41 = scmp.eq.s32.totalorder %s21, 0
      %p42 = por %p40, %p41
      %p43 = scmp.ne.s32.totalorder %s29, %s30
      %p44 = scmp.eq.s32.totalorder %s22, 1
      %p45 = por %p43, %p44
      %p47 = scmp.ne.s32.totalorder %s30, %s46
      %p48 = scmp.eq.s32.totalorder %s22, 0
      %p49 = por %p47, %p48
      %s51 = sadd.s32 %s50, 1
      %p54 = scmp.eq.s32.totalorder %s16, 1
      %p55 = scmp.ne.s32.totalorder %s50, %s52
      %p56 = scmp.eq.s32.totalorder %s16, 0
      %p57 = por %p55, %p56
      %p58 = scmp.ne.s32.totalorder %s50, %s52
      %p59 = scmp.eq.s32.totalorder %s21, 1
      %p60 = por %p58, %p59
      %p61 = scmp.ne.s32.totalorder %s52, %s53
      %p62 = scmp.eq.s32.totalorder %s21, 0
      %p63 = por %p61, %p62
      %p64 = scmp.ne.s32.totalorder %s52, %s53
      %p65 = scmp.eq.s32.totalorder %s22, 1
      %p66 = por %p64, %p65
      %p68 = scmp.ne.s32.totalorder %s53, %s67
      %p69 = scmp.eq.s32.totalorder %s22, 0
      %p70 = por %p68, %p69
      %s72 = sadd.s32 %s71, 1
      %p75 = scmp.eq.s32.totalorder %s16, 1
      %p76 = scmp.ne.s32.totalorder %s71, %s73
      %p77 = scmp.eq.s32.totalorder %s16, 0
      %p78 = por %p76, %p77
      %p79 = scmp.ne.s32.totalorder %s71, %s73
      %p80 = scmp.eq.s32.totalorder %s21, 1
      %p81 = por %p79, %p80
      %p82 = scmp.ne.s32.totalorder %s73, %s74
      %p83 = scmp.eq.s32.totalorder %s21, 0
      %p84 = por %p82, %p83
      %p85 = scmp.ne.s32.totalorder %s73, %s74
      %p86 = scmp.eq.s32.totalorder %s22, 1
      %p87 = por %p85, %p86
      %p89 = scmp.ne.s32.totalorder %s74, %s88
      %p90 = scmp.eq.s32.totalorder %s22, 0
      %p91 = por %p89, %p90
      %s92 = ssub.s32 %s16, %s23
      %p93 = scmp.eq.s32.totalorder %s92, 0
      %s95 = sadd.s32 %s94, 1
      %s96 = scalar_select %p93, %s94, %s95
      %p99 = pneg %p93
      %p100 = scmp.eq.s32.totalorder %s16, 1
      %p101 = por %p99, %p100
      %p102 = scmp.ne.s32.totalorder %s94, %s97
      %p103 = scmp.eq.s32.totalorder %s16, 0
      %p104 = por %p102, %p103
      %p105 = scmp.ne.s32.totalorder %s94, %s97
      %p106 = scmp.eq.s32.totalorder %s21, 1
      %p107 = por %p105, %p106
      %p108 = scmp.ne.s32.totalorder %s97, %s98
      %p109 = scmp.eq.s32.totalorder %s21, 0
      %p110 = por %p108, %p109
      %p111 = scmp.ne.s32.totalorder %s97, %s98
      %p112 = scmp.eq.s32.totalorder %s22, 1
      %p113 = por %p111, %p112
      %p115 = scmp.ne.s32.totalorder %s98, %s114
      %p116 = scmp.eq.s32.totalorder %s22, 0
      %p117 = por %p115, %p116
      %p118 = scmp.le.s32.totalorder 1, %s16
      %p119 = scmp.lt.s32.totalorder %s16, 3
      %p120 = pnand %p118, %p119
      %p121 = pneg %p120
      // Predicated region
      $region9: #{tpu_custom_call.1} parent=5 // pred_check
        _
      $region10: #{tpu_custom_call.1} parent=5 // pred_check_branch
        %123 = sbr.rel (%p120) target = $region12
      $region11: #{tpu_custom_call.1} parent=5 // pred_region
        %s124 = ssub.s32 %s16, 1
        // Predicated region
        $region13: #{tpu_custom_call.1} parent=11 // pred_check
          %p125 = pneg %p63
        $region14: #{tpu_custom_call.1} parent=11 // pred_check_branch
          %127 = sbr.rel (%p125) target = $region16
        $region15: #{tpu_custom_call.1} parent=11 // pred_region
          %129 = vsyncadd [#allocation6], 0
          %s130 = sshll.u32 %s1, 4
          %s131 = int_to_ptr.hbm [resolvable:$true] %s130
          %s132 = sshll.u32 [#allocation5], 4
          %s133 = int_to_ptr.vmem [resolvable:$true] %s132
          %138 = dma.hbm_to_vmem [thread:$0]  %s131, 1024, %s133, [#allocation6], 128, 128, 8
        $region16: #{tpu_custom_call.1} parent=11 // pred_fallthru
          _
        // Predicated region
        $region17: #{tpu_custom_call.1} parent=11 // pred_check
          %p139 = pneg %p84
        $region18: #{tpu_custom_call.1} parent=11 // pred_check_branch
          %141 = sbr.rel (%p139) target = $region20
        $region19: #{tpu_custom_call.1} parent=11 // pred_region
          %143 = vsyncadd [#allocation6], 0
          %s144 = sshll.u32 %s2, 4
          %s145 = int_to_ptr.hbm [resolvable:$true] %s144
          %s146 = sshll.u32 [#allocation7], 4
          %s147 = int_to_ptr.vmem [resolvable:$true] %s146
          %152 = dma.hbm_to_vmem [thread:$0]  %s145, 2048, %s147, [#allocation6], 256, 256, 16
        $region20: #{tpu_custom_call.1} parent=11 // pred_fallthru
          _
      $region12: #{tpu_custom_call.1} parent=5 // pred_fallthru
        _
      %p153 = scmp.lt.s32.totalorder %s16, 2
      // Predicated region
      $region21: #{tpu_custom_call.1} parent=5 // pred_check
        %p154 = pneg %p153
      $region22: #{tpu_custom_call.1} parent=5 // pred_check_branch
        %156 = sbr.rel (%p154) target = $region24
      $region23: #{tpu_custom_call.1} parent=5 // pred_region
        // Predicated region
        $region25: #{tpu_custom_call.1} parent=23 // pred_check
          %p157 = pneg %p36
        $region26: #{tpu_custom_call.1} parent=23 // pred_check_branch
          %159 = sbr.rel (%p157) target = $region28
        $region27: #{tpu_custom_call.1} parent=23 // pred_region
          %s160 = sand.u32 %s26, 1
          %s161 = scalar_lea.sflag [#allocation3], %s160
          %s162 = sand.u32 %s26, 1
          %s163 = smul.addr %s162, 32
          %s164 = scalar_lea.vmem [#allocation2], %s163
          %166 = vsyncadd %s161, 0
          %s167 = smul.addr %s16, 4
          %s168 = smul.addr %s167, 8
          %s169 = scalar_lea.hbm %s0, %s168
          %s170 = sshll.u32 %s169, 4
          %s171 = int_to_ptr.hbm [resolvable:$true] %s170
          %s172 = sshll.u32 %s164, 4
          %s173 = int_to_ptr.vmem [resolvable:$true] %s172
          %178 = dma.hbm_to_vmem [thread:$0]  %s171, 512, %s173, %s161, 256, 256, 16
        $region28: #{tpu_custom_call.1} parent=23 // pred_fallthru
          _
      $region24: #{tpu_custom_call.1} parent=5 // pred_fallthru
        _
      %p179 = scmp.le.s32.totalorder 1, %s16
      %p180 = scmp.lt.s32.totalorder %s16, 3
      %p181 = pnand %p179, %p180
      %p182 = pneg %p181
      // Predicated region
      $region29: #{tpu_custom_call.1} parent=5 // pred_check
        _
      $region30: #{tpu_custom_call.1} parent=5 // pred_check_branch
        %184 = sbr.rel (%p181) target = $region32
      $region31: #{tpu_custom_call.1} parent=5 // pred_region
        %s185 = ssub.s32 %s16, 1
        %s186 = sand.u32 %s29, 1
        %s187 = scalar_lea.sflag [#allocation3], %s186
        %s188 = sand.u32 %s29, 1
        %s189 = smul.addr %s188, 32
        %s190 = scalar_lea.vmem [#allocation2], %s189
        // Predicated region
        $region33: #{tpu_custom_call.1} parent=31 // pred_check
          %p191 = pneg %p42
        $region34: #{tpu_custom_call.1} parent=31 // pred_check_branch
          %193 = sbr.rel (%p191) target = $region36
        $region35: #{tpu_custom_call.1} parent=31 // pred_region
          %195 = dma.done %s187, 512
        $region36: #{tpu_custom_call.1} parent=31 // pred_fallthru
          _
        // Predicated region
        $region37: #{tpu_custom_call.1} parent=31 // pred_check
          %p196 = pneg %p63
        $region38: #{tpu_custom_call.1} parent=31 // pred_check_branch
          %198 = sbr.rel (%p196) target = $region40
        $region39: #{tpu_custom_call.1} parent=31 // pred_region
          %200 = dma.done [#allocation6], 1024
        $region40: #{tpu_custom_call.1} parent=31 // pred_fallthru
          _
        // Predicated region
        $region41: #{tpu_custom_call.1} parent=31 // pred_check
          %p201 = pneg %p84
        $region42: #{tpu_custom_call.1} parent=31 // pred_check_branch
          %203 = sbr.rel (%p201) target = $region44
        $region43: #{tpu_custom_call.1} parent=31 // pred_region
          %205 = dma.done [#allocation6], 2048
        $region44: #{tpu_custom_call.1} parent=31 // pred_fallthru
          _
        %s206 = sand.u32 %s29, 1
        %s207 = scalar_lea.sflag [#allocation3], %s206
        %s208 = sand.u32 %s29, 1
        %s209 = smul.addr %s208, 32
        %s210 = scalar_lea.vmem [#allocation2], %s209
        %p211 = pneg %p42
        %p212 = pneg %p39
        %p213 = pneg %p63
        %p214 = pneg %p60
        %p215 = pneg %p84
        %p216 = pneg %p81
        %p217 = pneg %p110
        %p218 = pneg %p107
        %s219 = sand.u32 %s97, 1
        %s220 = scalar_lea.sflag [#allocation4], %s219
        %s221 = sand.u32 %s97, 1
        %s222 = smul.addr %s221, 32
        %s223 = scalar_lea.vmem [#allocation8], %s222
        %v224 = vld [vmem:[%s190] sm:$0xff]
        %v225 = vld [vmem:[%s190 + $0x8] sm:$0xff]
        %v226 = vld [vmem:[%s190 + $0x10] sm:$0xff]
        %v227 = vld [vmem:[%s190 + $0x18] sm:$0xff]
        %v228 = vld [vmem:[#allocation5] sm:$0xff]
        %v229 = vld [vmem:[#allocation5 + $0x8] sm:$0xff]
        %v230 = vld [vmem:[#allocation7] sm:$0xff]
        %v231 = vld [vmem:[#allocation7 + $0x8] sm:$0xff]
        %v232 = vld [vmem:[#allocation7 + $0x10] sm:$0xff]
        %v233 = vld [vmem:[#allocation7 + $0x18] sm:$0xff]
        %vm234 = vcmask 130048
        %v236 = vsel %vm234, %v228, 0
        %v239 = vsel %vm234, %v229, 0
        %241 = vmatpush.msra.mxu0 0.0
        %242 = vmatpush.msra.mxu0 0.0
        %243 = vmatpush.msra.mxu0 0.0
        %244 = vmatpush.msra.mxu0 0.0
        %245 = vmatpush.msra.mxu0 0.0
        %246 = vmatpush.msra.mxu0 0.0
        %247 = vmatpush.msra.mxu0 0.0
        %248 = vmatpush.msra.mxu0 0.0
        %249 = vmatpush.msra.mxu0 0.0
        %250 = vmatpush.msra.mxu0 0.0
        %251 = vmatpush.msra.mxu0 0.0
        %252 = vmatpush.msra.mxu0 0.0
        %253 = vmatpush.msra.mxu0 0.0
        %254 = vmatpush.msra.mxu0 0.0
        %255 = vmatpush.msra.mxu0 %v226
        %256 = vmatpush.msra.mxu0 %v224
        %257 = vmatmul.f32.gmra.mxu0 %v236
        %v258 = vpop.f32.mrf.mxu0
        %v259 = vadd.f32 %v230, %v258
        %260 = vmatmul.f32.gmra.mxu0 %v239
        %v261 = vpop.f32.mrf.mxu0
        %v262 = vadd.f32 %v232, %v261
        %263 = vdwg.mxu0
        %264 = vmatpush.msra.mxu0 0.0
        %265 = vmatpush.msra.mxu0 0.0
        %266 = vmatpush.msra.mxu0 0.0
        %267 = vmatpush.msra.mxu0 0.0
        %268 = vmatpush.msra.mxu0 0.0
        %269 = vmatpush.msra.mxu0 0.0
        %270 = vmatpush.msra.mxu0 0.0
        %271 = vmatpush.msra.mxu0 0.0
        %272 = vmatpush.msra.mxu0 0.0
        %273 = vmatpush.msra.mxu0 0.0
        %274 = vmatpush.msra.mxu0 0.0
        %275 = vmatpush.msra.mxu0 0.0
        %276 = vmatpush.msra.mxu0 0.0
        %277 = vmatpush.msra.mxu0 0.0
        %278 = vmatpush.msra.mxu0 %v227
        %279 = vmatpush.msra.mxu0 %v225
        %280 = vmatmul.f32.gmra.mxu0 %v236
        %v281 = vpop.f32.mrf.mxu0
        %v282 = vadd.f32 %v231, %v281
        %283 = vmatmul.f32.gmra.mxu0 %v239
        %v284 = vpop.f32.mrf.mxu0
        %v285 = vadd.f32 %v233, %v284
        %286 = vdwg.mxu0
        %v287 = vmax.f32 %v259, 0.0
        %v288 = vmax.f32 %v282, 0.0
        %v289 = vmax.f32 %v262, 0.0
        %v290 = vmax.f32 %v285, 0.0
        %v291 = vadd.f32 %v287, %v224
        %v292 = vadd.f32 %v288, %v225
        %v293 = vadd.f32 %v289, %v226
        %v294 = vadd.f32 %v290, %v227
        %s295 = scalar_lea.vmem [#allocation5], 16
        %v296 = vld [vmem:[%s295] sm:$0xff]
        %v297 = vld [vmem:[%s295 + $0x8] sm:$0xff]
        %s298 = scalar_lea.vmem [#allocation7], 32
        %v299 = vld [vmem:[%s298] sm:$0xff]
        %v300 = vld [vmem:[%s298 + $0x8] sm:$0xff]
        %v301 = vld [vmem:[%s298 + $0x10] sm:$0xff]
        %v302 = vld [vmem:[%s298 + $0x18] sm:$0xff]
        %v304 = vsel %vm234, %v296, 0
        %v307 = vsel %vm234, %v297, 0
        %309 = vmatpush.msra.mxu0 0.0
        %310 = vmatpush.msra.mxu0 0.0
        %311 = vmatpush.msra.mxu0 0.0
        %312 = vmatpush.msra.mxu0 0.0
        %313 = vmatpush.msra.mxu0 0.0
        %314 = vmatpush.msra.mxu0 0.0
        %315 = vmatpush.msra.mxu0 0.0
        %316 = vmatpush.msra.mxu0 0.0
        %317 = vmatpush.msra.mxu0 0.0
        %318 = vmatpush.msra.mxu0 0.0
        %319 = vmatpush.msra.mxu0 0.0
        %320 = vmatpush.msra.mxu0 0.0
        %321 = vmatpush.msra.mxu0 0.0
        %322 = vmatpush.msra.mxu0 0.0
        %323 = vmatpush.msra.mxu0 %v293
        %324 = vmatpush.msra.mxu0 %v291
        %325 = vmatmul.f32.gmra.mxu0 %v304
        %v326 = vpop.f32.mrf.mxu0
        %v327 = vadd.f32 %v299, %v326
        %328 = vmatmul.f32.gmra.mxu0 %v307
        %v329 = vpop.f32.mrf.mxu0
        %v330 = vadd.f32 %v301, %v329
        %331 = vdwg.mxu0
        %332 = vmatpush.msra.mxu0 0.0
        %333 = vmatpush.msra.mxu0 0.0
        %334 = vmatpush.msra.mxu0 0.0
        %335 = vmatpush.msra.mxu0 0.0
        %336 = vmatpush.msra.mxu0 0.0
        %337 = vmatpush.msra.mxu0 0.0
        %338 = vmatpush.msra.mxu0 0.0
        %339 = vmatpush.msra.mxu0 0.0
        %340 = vmatpush.msra.mxu0 0.0
        %341 = vmatpush.msra.mxu0 0.0
        %342 = vmatpush.msra.mxu0 0.0
        %343 = vmatpush.msra.mxu0 0.0
        %344 = vmatpush.msra.mxu0 0.0
        %345 = vmatpush.msra.mxu0 0.0
        %346 = vmatpush.msra.mxu0 %v294
        %347 = vmatpush.msra.mxu0 %v292
        %348 = vmatmul.f32.gmra.mxu0 %v304
        %v349 = vpop.f32.mrf.mxu0
        %v350 = vadd.f32 %v300, %v349
        %351 = vmatmul.f32.gmra.mxu0 %v307
        %v352 = vpop.f32.mrf.mxu0
        %v353 = vadd.f32 %v302, %v352
        %354 = vdwg.mxu0
        %v355 = vmax.f32 %v327, 0.0
        %v356 = vmax.f32 %v350, 0.0
        %v357 = vmax.f32 %v330, 0.0
        %v358 = vmax.f32 %v353, 0.0
        %v359 = vadd.f32 %v355, %v291
        %v360 = vadd.f32 %v356, %v292
        %v361 = vadd.f32 %v357, %v293
        %v362 = vadd.f32 %v358, %v294
        %s363 = scalar_lea.vmem [#allocation5], 32
        %v364 = vld [vmem:[%s363] sm:$0xff]
        %v365 = vld [vmem:[%s363 + $0x8] sm:$0xff]
        %s366 = scalar_lea.vmem [#allocation7], 64
        %v367 = vld [vmem:[%s366] sm:$0xff]
        %v368 = vld [vmem:[%s366 + $0x8] sm:$0xff]
        %v369 = vld [vmem:[%s366 + $0x10] sm:$0xff]
        %v370 = vld [vmem:[%s366 + $0x18] sm:$0xff]
        %v372 = vsel %vm234, %v364, 0
        %v375 = vsel %vm234, %v365, 0
        %377 = vmatpush.msra.mxu0 0.0
        %378 = vmatpush.msra.mxu0 0.0
        %379 = vmatpush.msra.mxu0 0.0
        %380 = vmatpush.msra.mxu0 0.0
        %381 = vmatpush.msra.mxu0 0.0
        %382 = vmatpush.msra.mxu0 0.0
        %383 = vmatpush.msra.mxu0 0.0
        %384 = vmatpush.msra.mxu0 0.0
        %385 = vmatpush.msra.mxu0 0.0
        %386 = vmatpush.msra.mxu0 0.0
        %387 = vmatpush.msra.mxu0 0.0
        %388 = vmatpush.msra.mxu0 0.0
        %389 = vmatpush.msra.mxu0 0.0
        %390 = vmatpush.msra.mxu0 0.0
        %391 = vmatpush.msra.mxu0 %v361
        %392 = vmatpush.msra.mxu0 %v359
        %393 = vmatmul.f32.gmra.mxu0 %v372
        %v394 = vpop.f32.mrf.mxu0
        %v395 = vadd.f32 %v367, %v394
        %396 = vmatmul.f32.gmra.mxu0 %v375
        %v397 = vpop.f32.mrf.mxu0
        %v398 = vadd.f32 %v369, %v397
        %399 = vdwg.mxu0
        %400 = vmatpush.msra.mxu0 0.0
        %401 = vmatpush.msra.mxu0 0.0
        %402 = vmatpush.msra.mxu0 0.0
        %403 = vmatpush.msra.mxu0 0.0
        %404 = vmatpush.msra.mxu0 0.0
        %405 = vmatpush.msra.mxu0 0.0
        %406 = vmatpush.msra.mxu0 0.0
        %407 = vmatpush.msra.mxu0 0.0
        %408 = vmatpush.msra.mxu0 0.0
        %409 = vmatpush.msra.mxu0 0.0
        %410 = vmatpush.msra.mxu0 0.0
        %411 = vmatpush.msra.mxu0 0.0
        %412 = vmatpush.msra.mxu0 0.0
        %413 = vmatpush.msra.mxu0 0.0
        %414 = vmatpush.msra.mxu0 %v362
        %415 = vmatpush.msra.mxu0 %v360
        %416 = vmatmul.f32.gmra.mxu0 %v372
        %v417 = vpop.f32.mrf.mxu0
        %v418 = vadd.f32 %v368, %v417
        %419 = vmatmul.f32.gmra.mxu0 %v375
        %v420 = vpop.f32.mrf.mxu0
        %v421 = vadd.f32 %v370, %v420
        %422 = vdwg.mxu0
        %v423 = vmax.f32 %v395, 0.0
        %v424 = vmax.f32 %v418, 0.0
        %v425 = vmax.f32 %v398, 0.0
        %v426 = vmax.f32 %v421, 0.0
        %v427 = vadd.f32 %v423, %v359
        %v428 = vadd.f32 %v424, %v360
        %v429 = vadd.f32 %v425, %v361
        %v430 = vadd.f32 %v426, %v362
        %s431 = scalar_lea.vmem [#allocation5], 48
        %v432 = vld [vmem:[%s431] sm:$0xff]
        %v433 = vld [vmem:[%s431 + $0x8] sm:$0xff]
        %s434 = scalar_lea.vmem [#allocation7], 96
        %v435 = vld [vmem:[%s434] sm:$0xff]
        %v436 = vld [vmem:[%s434 + $0x8] sm:$0xff]
        %v437 = vld [vmem:[%s434 + $0x10] sm:$0xff]
        %v438 = vld [vmem:[%s434 + $0x18] sm:$0xff]
        %v440 = vsel %vm234, %v432, 0
        %v443 = vsel %vm234, %v433, 0
        %445 = vmatpush.msra.mxu0 0.0
        %446 = vmatpush.msra.mxu0 0.0
        %447 = vmatpush.msra.mxu0 0.0
        %448 = vmatpush.msra.mxu0 0.0
        %449 = vmatpush.msra.mxu0 0.0
        %450 = vmatpush.msra.mxu0 0.0
        %451 = vmatpush.msra.mxu0 0.0
        %452 = vmatpush.msra.mxu0 0.0
        %453 = vmatpush.msra.mxu0 0.0
        %454 = vmatpush.msra.mxu0 0.0
        %455 = vmatpush.msra.mxu0 0.0
        %456 = vmatpush.msra.mxu0 0.0
        %457 = vmatpush.msra.mxu0 0.0
        %458 = vmatpush.msra.mxu0 0.0
        %459 = vmatpush.msra.mxu0 %v429
        %460 = vmatpush.msra.mxu0 %v427
        %461 = vmatmul.f32.gmra.mxu0 %v440
        %v462 = vpop.f32.mrf.mxu0
        %v463 = vadd.f32 %v435, %v462
        %464 = vmatmul.f32.gmra.mxu0 %v443
        %v465 = vpop.f32.mrf.mxu0
        %v466 = vadd.f32 %v437, %v465
        %467 = vdwg.mxu0
        %468 = vmatpush.msra.mxu0 0.0
        %469 = vmatpush.msra.mxu0 0.0
        %470 = vmatpush.msra.mxu0 0.0
        %471 = vmatpush.msra.mxu0 0.0
        %472 = vmatpush.msra.mxu0 0.0
        %473 = vmatpush.msra.mxu0 0.0
        %474 = vmatpush.msra.mxu0 0.0
        %475 = vmatpush.msra.mxu0 0.0
        %476 = vmatpush.msra.mxu0 0.0
        %477 = vmatpush.msra.mxu0 0.0
        %478 = vmatpush.msra.mxu0 0.0
        %479 = vmatpush.msra.mxu0 0.0
        %480 = vmatpush.msra.mxu0 0.0
        %481 = vmatpush.msra.mxu0 0.0
        %482 = vmatpush.msra.mxu0 %v430
        %483 = vmatpush.msra.mxu0 %v428
        %484 = vmatmul.f32.gmra.mxu0 %v440
        %v485 = vpop.f32.mrf.mxu0
        %v486 = vadd.f32 %v436, %v485
        %487 = vmatmul.f32.gmra.mxu0 %v443
        %v488 = vpop.f32.mrf.mxu0
        %v489 = vadd.f32 %v438, %v488
        %490 = vdwg.mxu0
        %v491 = vmax.f32 %v463, 0.0
        %v492 = vmax.f32 %v486, 0.0
        %v493 = vmax.f32 %v466, 0.0
        %v494 = vmax.f32 %v489, 0.0
        %v495 = vadd.f32 %v491, %v427
        %v496 = vadd.f32 %v492, %v428
        %v497 = vadd.f32 %v493, %v429
        %v498 = vadd.f32 %v494, %v430
        %499 = vst [vmem:[%s223] sm:$0xff] %v495
        %500 = vst [vmem:[%s223 + $0x8] sm:$0xff] %v496
        %501 = vst [vmem:[%s223 + $0x10] sm:$0xff] %v497
        %502 = vst [vmem:[%s223 + $0x18] sm:$0xff] %v498
        %s503 = sand.u32 %s97, 1
        %s504 = scalar_lea.sflag [#allocation4], %s503
        %s505 = sand.u32 %s97, 1
        %s506 = smul.addr %s505, 32
        %s507 = scalar_lea.vmem [#allocation8], %s506
        // Predicated region
        $region45: #{tpu_custom_call.1} parent=31 // pred_check
          %p508 = pneg %p107
        $region46: #{tpu_custom_call.1} parent=31 // pred_check_branch
          %510 = sbr.rel (%p508) target = $region48
        $region47: #{tpu_custom_call.1} parent=31 // pred_region
          %512 = vsyncadd %s504, 0
          %s513 = smul.addr %s21, 4
          %s514 = smul.addr %s513, 8
          %s515 = scalar_lea.hbm %s3, %s514
          %s516 = sshll.u32 %s507, 4
          %s517 = int_to_ptr.vmem [resolvable:$true] %s516
          %s518 = sshll.u32 %s515, 4
          %s519 = int_to_ptr.hbm [resolvable:$true] %s518
          %524 = dma.vmem_to_hbm [thread:$0]  %s517, 512, %s519, %s504, 256, 256, 16
        $region48: #{tpu_custom_call.1} parent=31 // pred_fallthru
          _
      $region32: #{tpu_custom_call.1} parent=5 // pred_fallthru
        _
      %p525 = scmp.le.s32.totalorder 2, %s16
      // Predicated region
      $region49: #{tpu_custom_call.1} parent=5 // pred_check
        %p526 = pneg %p525
      $region50: #{tpu_custom_call.1} parent=5 // pred_check_branch
        %528 = sbr.rel (%p526) target = $region52
      $region51: #{tpu_custom_call.1} parent=5 // pred_region
        %s529 = ssub.s32 %s16, 2
        // Predicated region
        $region53: #{tpu_custom_call.1} parent=51 // pred_check
          %p530 = pneg %p113
        $region54: #{tpu_custom_call.1} parent=51 // pred_check_branch
          %532 = sbr.rel (%p530) target = $region56
        $region55: #{tpu_custom_call.1} parent=51 // pred_region
          %s533 = sand.u32 %s98, 1
          %s534 = scalar_lea.sflag [#allocation4], %s533
          %s535 = sand.u32 %s98, 1
          %s536 = smul.addr %s535, 32
          %s537 = scalar_lea.vmem [#allocation8], %s536
          %539 = dma.done %s534, 512
        $region56: #{tpu_custom_call.1} parent=51 // pred_fallthru
          _
      $region52: #{tpu_custom_call.1} parent=5 // pred_fallthru
        _
    $region6: #{tpu_custom_call.1} parent=1 // loop_footer
      %s20 = sadd.s32 1, %s16
    $region7: #{tpu_custom_call.1} parent=1 // loop_footer_branch
      %15 = sbr.rel target = $region3
    $region8: #{tpu_custom_call.1} parent=1 // loop_exit
      _
    %540 = vsyncpa [#allocation3], 1
    %s541 = scalar_lea.sflag [#allocation3], 1
    %542 = vsyncpa %s541, 1
    %543 = vsyncpa [#allocation6], 1
    %544 = vsyncpa [#allocation4], 1
    %s545 = scalar_lea.sflag [#allocation4], 1
    %546 = vsyncpa %s545, 1

</llo_original>
